<compile_context>
chip_gen: v6e
topology: v6e:2x2x1
jax: 0.10.0
libtpu: 0.0.40
codegen_flags: <defaults>
</compile_context>

<pallas_src>
import jax
import jax.numpy as jnp
from jax.experimental import pallas as pl
from jax.experimental.pallas import tpu as pltpu

_LANE = 128                     # TPU lane width (fast last dim)
_MAX_COLS = 2048                # lane-dense output width (multiple of 128)
_TILE_BYTES = 4 * 1024 * 1024   # ~4 MiB per tile; with in+out double buffering
                                # -> ~16 MiB, safe on v5e/v6e/v7x scoped VMEM
_VMEM_LIMIT = 32 * 1024 * 1024  # scoped-VMEM ceiling requested from Mosaic;
                                # leaves headroom under v7x's 64 MiB physical


def _copy_kernel(x_ref, o_ref):
    # Same-rank pure copy: no broadcasts, no casts -> straight vld/vst stream.
    o_ref[...] = x_ref[...]


def _dma_copy_kernel(x_ref, o_ref, sem):
    # Direct HBM->HBM DMA: skips the VMEM/vreg round trip entirely.
    cp = pltpu.make_async_copy(x_ref, o_ref, sem)
    cp.start()
    cp.wait()


def _sublane_multiple(dtype) -> int:
    # f32 -> 8, bf16/f16 -> 16, int8/fp8 -> 32 (sub-32-bit packs along sublanes).
    return max(8, 32 // jnp.dtype(dtype).itemsize)


def _choose_layout(total: int, dtype):
    """Pick a lane-dense (rows, cols, block_rows) factorization, or None."""
    if total % _LANE != 0:
        return None
    itemsize = jnp.dtype(dtype).itemsize
    sub = _sublane_multiple(dtype)
    # Widest power-of-two multiple of 128 (capped) that divides total.
    cols = _LANE
    while cols * 2 <= _MAX_COLS and total % (cols * 2) == 0:
        cols *= 2
    rows = total // cols
    # Size block_rows by the VMEM byte budget, rounded down to the dtype's
    # sublane multiple.  No exact-divisor requirement: the ragged last block
    # is masked by Pallas, which is harmless for a pure copy.
    budget_rows = max(sub, _TILE_BYTES // (cols * itemsize))
    budget_rows = (budget_rows // sub) * sub
    block_rows = rows if rows <= budget_rows else budget_rows
    return rows, cols, block_rows


def unsqueeze0(x: jax.Array, *, materialize: bool = True) -> jax.Array:
    """Equivalent of torch.Tensor.unsqueeze(0): adds a leading dim of size 1.

    The unsqueeze itself is metadata-only; with materialize=False this returns
    the free jnp.expand_dims view (fastest possible).  With materialize=True
    the data is copied through a Pallas kernel at ~HBM roofline.
    """
    out_shape_final = (1,) + x.shape
    if not materialize:
        return jnp.expand_dims(x, 0)

    total = x.size
    layout = _choose_layout(total, x.dtype)

    if layout is None:
        # Non-lane-dense total: single HBM->HBM DMA copy.  Zero VMEM footprint,
        # valid for any shape/size (no whole-array VMEM block, no OOM cliff).
        y = pl.pallas_call(
            _dma_copy_kernel,
            out_shape=jax.ShapeDtypeStruct(x.shape, x.dtype),
            in_specs=[pl.BlockSpec(memory_space=pl.ANY)],
            out_specs=pl.BlockSpec(memory_space=pl.ANY),
            scratch_shapes=[pltpu.SemaphoreType.DMA],
            cost_estimate=pl.CostEstimate(
                flops=0, transcendentals=0, bytes_accessed=2 * x.nbytes),
        )(x)
        return y.reshape(out_shape_final)

    rows, cols, block_rows = layout
    x2d = x.reshape(rows, cols)          # free metadata reshape
    grid = (pl.cdiv(rows, block_rows),)  # ragged last block handled by masking

    y2d = pl.pallas_call(
        _copy_kernel,
        out_shape=jax.ShapeDtypeStruct((rows, cols), x.dtype),
        grid=grid,
        in_specs=[pl.BlockSpec((block_rows, cols), lambda i: (i, 0))],
        out_specs=pl.BlockSpec((block_rows, cols), lambda i: (i, 0)),
        compiler_params=pltpu.CompilerParams(
            dimension_semantics=("parallel",),  # lets v7x shard across 2 TCs
            vmem_limit_bytes=_VMEM_LIMIT,
        ),
        cost_estimate=pl.CostEstimate(
            flops=0, transcendentals=0, bytes_accessed=2 * x.nbytes),
    )(x2d)

    return y2d.reshape(out_shape_final)  # free metadata reshape


if __name__ == "__main__":
    key = jax.random.PRNGKey(0)

    # NCHW input (batch=2, channels=4, 16x16 spatial) -> (1, 2, 4, 16, 16).
    x = jax.random.normal(key, (2, 4, 16, 16), dtype=jnp.float32)
    y = unsqueeze0(x)
    jax.block_until_ready(y)
    ref = jnp.expand_dims(x, 0)
    assert y.shape == (1, 2, 4, 16, 16), y.shape
    assert y.dtype == x.dtype
    assert jnp.array_equal(y, ref)

    # Exercise the non-lane-dense fallback (size not a multiple of 128).
    x2 = jax.random.normal(key, (3, 5, 7), dtype=jnp.float32)
    y2 = unsqueeze0(x2)
    jax.block_until_ready(y2)
    assert y2.shape == (1, 3, 5, 7), y2.shape
    assert jnp.array_equal(y2, jnp.expand_dims(x2, 0))

    print("KERNEL_OK")
</pallas_src>

<mosaic_0001>
module attributes {stable_mosaic.version = 11 : i64} {
  func.func @_copy_kernel(%arg0: i32, %arg1: memref<1x2048xf32, #tpu.memory_space<vmem>>, %arg2: memref<1x2048xf32, #tpu.memory_space<vmem>>) attributes {dimension_semantics = [#tpu.dimension_semantics<parallel>], iteration_bounds = array<i64: 1>, scalar_prefetch = 0 : i64, scratch_operands = 0 : i64, tpu.core_type = #tpu.core_type<tc>, window_params = [{transform_indices = @transform_0, window_bounds = array<i64: 1, 2048>}, {transform_indices = @transform_1, window_bounds = array<i64: 1, 2048>}]} {
    %c0 = arith.constant 0 : index
    %c0_0 = arith.constant 0 : index
    %0 = vector.load %arg1[%c0, %c0_0] : memref<1x2048xf32, #tpu.memory_space<vmem>>, vector<1x2048xf32>
    %c0_1 = arith.constant 0 : index
    %c0_2 = arith.constant 0 : index
    %1 = vector.load %arg2[%c0_1, %c0_2] : memref<1x2048xf32, #tpu.memory_space<vmem>>, vector<1x2048xf32>
    tpu.vector_store %arg2[%c0_1, %c0_2], %0 {strides = array<i32>} : memref<1x2048xf32, #tpu.memory_space<vmem>>, vector<1x2048xf32>,
    return
  }
  func.func @transform_0(%arg0: i32) -> (i32, i32) {
    %c0_i32 = arith.constant 0 : i32
    %c0_i32_0 = arith.constant 0 : i32
    return %arg0, %c0_i32 : i32, i32
  }
  func.func @transform_1(%arg0: i32) -> (i32, i32) {
    %c0_i32 = arith.constant 0 : i32
    %c0_i32_0 = arith.constant 0 : i32
    return %arg0, %c0_i32 : i32, i32
  }
}

</mosaic_0001>

<llo_original>
// kernel: tpu_custom_call.1
$region0: #{tpu_custom_call.1}
  #allocation0 [shape = 'u32[]', space=smem, size = 0x4, offset = 0x4, fixed_abs, tag = 'smem constant byte address 0x4 - core index']
  #allocation1 [shape = 'u32[144,128]{1,0:T(1,128)}', space=vmem, size = 0x12000, scoped, tag = 'internal scratch']
  %s0 = inlined_call_operand.hbm [shape: f32[1,2048], index: 0, kind: input, shape index: {}]
  %s1 = inlined_call_operand.hbm [shape: f32[1,2048], index: 1, kind: output, shape index: {}]
  %s2 = sld [smem:[#allocation0]]
  $region18: #{tpu_custom_call.1} parent=0
    _
  %s4 = ssub.s32 1, %s2
  %s5 = scalar_select 0, %s4, %s2
  $region1: #{tpu_custom_call.1} parent=0
    #allocation2 [shape = 'u8[8192]{0}', space=vmem, size = 0x2000, scoped, tag = 'input window, operand 0, single buffered']
    #allocation3 [shape = 's32[1]{0}', space=sflag, size = 0x4, scoped, tag = 'scoped memory for tpu_custom_call.1']
    #allocation4 [shape = 's32[1]{0}', space=sflag, size = 0x4, scoped, tag = 'scoped memory for tpu_custom_call.1']
    #allocation5 [shape = 'u8[8192]{0}', space=vmem, size = 0x2000, scoped, tag = 'output window, operand 0, single buffered']
    %6 = vsyncpa [#allocation3], 0
    %7 = vsyncpa [#allocation4], 0
    // Predicated region
    $region2: #{tpu_custom_call.1} parent=1 // pred_check
      _
    $region3: #{tpu_custom_call.1} parent=1 // pred_check_branch
      %9 = sbr.rel (0) target = $region5
    $region4: #{tpu_custom_call.1} parent=1 // pred_region
      %s11 = ssub.s32 256, 256
      %12 = vsyncadd [#allocation3], %s11
      %s14 = sshll.u32 [#allocation2], 4
      %s15 = int_to_ptr.vmem [resolvable:$true] %s14
      %17 = dma.hbm_to_vmem [thread:$0]  %s0, 256, %s15, [#allocation3]
    $region5: #{tpu_custom_call.1} parent=1 // pred_fallthru
      _
    // Predicated region
    $region6: #{tpu_custom_call.1} parent=1 // pred_check
      _
    $region7: #{tpu_custom_call.1} parent=1 // pred_check_branch
      %19 = sbr.rel (0) target = $region9
    $region8: #{tpu_custom_call.1} parent=1 // pred_region
      %20 = dma.done [#allocation3], 256
    $region9: #{tpu_custom_call.1} parent=1 // pred_fallthru
      _
    %v21 = vld [vmem:[#allocation2] sm:$0xff]
    %v22 = vld [vmem:[#allocation2 + $0x8] sm:$0xff]
    %23 = vst [vmem:[#allocation5] sm:$0xff] %v21
    %24 = vst [vmem:[#allocation5 + $0x8] sm:$0xff] %v22
    // Predicated region
    $region10: #{tpu_custom_call.1} parent=1 // pred_check
      _
    $region11: #{tpu_custom_call.1} parent=1 // pred_check_branch
      %26 = sbr.rel (0) target = $region13
    $region12: #{tpu_custom_call.1} parent=1 // pred_region
      %s28 = ssub.s32 256, 256
      %29 = vsyncadd [#allocation4], %s28
      %s31 = sshll.u32 [#allocation5], 4
      %s32 = int_to_ptr.vmem [resolvable:$true] %s31
      %34 = dma.vmem_to_hbm [thread:$0]  %s32, 256, %s1, [#allocation4]
    $region13: #{tpu_custom_call.1} parent=1 // pred_fallthru
      _
    // Predicated region
    $region14: #{tpu_custom_call.1} parent=1 // pred_check
      _
    $region15: #{tpu_custom_call.1} parent=1 // pred_check_branch
      %36 = sbr.rel (0) target = $region17
    $region16: #{tpu_custom_call.1} parent=1 // pred_region
      %37 = dma.done [#allocation4], 256
    $region17: #{tpu_custom_call.1} parent=1 // pred_fallthru
      _
    %38 = vsyncpa [#allocation3], 1
    %39 = vsyncpa [#allocation4], 1

</llo_original>
